<compile_context>
chip_gen: v7x
topology: tpu7x:2x2x1
jax: 0.10.0
libtpu: 0.0.40
codegen_flags: <defaults>
</compile_context>

<pallas_src>
import functools
import math

import jax
import jax.numpy as jnp
from jax import lax
from jax.experimental import pallas as pl
from jax.experimental.pallas import tpu as pltpu


# ---------------------------------------------------------------------------
# Tiling helpers
# ---------------------------------------------------------------------------
def _pick_tile(dim, preferred, align):
    """Largest tile <= preferred that is a multiple of `align` and divides `dim`.
    Falls back to the full dim (which is exempt from the (8,128) rule)."""
    if dim <= preferred:
        return dim
    t = (preferred // align) * align
    while t >= align:
        if dim % t == 0:
            return t
        t -= align
    return dim


def _vmem_limit(block_bytes):
    """Scoped-VMEM cap from the per-step block footprint, with double-buffering
    and headroom; never below the 32 MiB default, capped at 128 MiB."""
    return int(min(max(2 * block_bytes + (4 << 20), 32 << 20), 128 << 20))


# ---------------------------------------------------------------------------
# Kernel 1: tiled dense projection  out = x @ w_t + b   (K-reduction in grid)
# ---------------------------------------------------------------------------
def _linear_kernel(x_ref, w_ref, b_ref, o_ref, acc_ref):
    k = pl.program_id(2)

    @pl.when(k == 0)
    def _():
        acc_ref[...] = jnp.zeros_like(acc_ref)

    acc_ref[...] += jnp.dot(x_ref[...], w_ref[...],
                            preferred_element_type=jnp.float32)

    @pl.when(k == pl.num_programs(2) - 1)
    def _():
        o_ref[...] = (acc_ref[...] + b_ref[...]).astype(o_ref.dtype)


def linear(x2d, w_t, bias):
    """x2d: (M, Din); w_t: (Din, Dout) pre-transposed; bias: (Dout,)."""
    M, Din = x2d.shape
    Dout = w_t.shape[1]
    tm = _pick_tile(M, 256, 8)
    tn = _pick_tile(Dout, 256, 128)
    tk = _pick_tile(Din, 512, 128)
    grid = (M // tm, Dout // tn, Din // tk)
    b2 = bias.reshape(1, Dout)

    blk_bytes = 4 * (tm * tk + tk * tn + tn + 2 * tm * tn)
    return pl.pallas_call(
        _linear_kernel,
        out_shape=jax.ShapeDtypeStruct((M, Dout), jnp.float32),
        grid=grid,
        in_specs=[
            pl.BlockSpec((tm, tk), lambda i, j, k: (i, k)),
            pl.BlockSpec((tk, tn), lambda i, j, k: (k, j)),
            pl.BlockSpec((1, tn), lambda i, j, k: (0, j)),
        ],
        out_specs=pl.BlockSpec((tm, tn), lambda i, j, k: (i, j)),
        scratch_shapes=[pltpu.VMEM((tm, tn), jnp.float32)],
        compiler_params=pltpu.CompilerParams(
            dimension_semantics=("parallel", "parallel", "arbitrary"),
            vmem_limit_bytes=_vmem_limit(blk_bytes),
        ),
    )(x2d, w_t, b2)


# ---------------------------------------------------------------------------
# Kernel 2: scaled-dot-product attention
#   one (batch, query-tile) step per grid point; all heads processed per step.
# ---------------------------------------------------------------------------
def _attn_kernel(q_ref, k_ref, v_ref, o_ref, w_ref, *, scale):
    H, _, _ = q_ref.shape
    q = q_ref[...] * scale                                   # (H, tq, dk)  scale folded into Q
    k = k_ref[...]                                           # (H, Sk, dk)
    v = v_ref[...]                                           # (H, Sk, dk)

    # scores[h, q, s] = sum_d q[h, q, d] * k[h, s, d]  -- no k transpose/relayout.
    s = lax.dot_general(q, k, (((2,), (2,)), ((0,), (0,))),
                        preferred_element_type=jnp.float32)  # (H, tq, Sk)
    m = jnp.max(s, axis=-1, keepdims=True)
    e = jnp.exp(s - m)
    denom = jnp.sum(e, axis=-1, keepdims=True)
    attn = e * pl.reciprocal(denom, approx=True)             # EUP reciprocal
    w_ref[...] = attn.astype(w_ref.dtype)

    # out[h, q, d] = sum_s attn[h, q, s] * v[h, s, d]
    o = lax.dot_general(attn.astype(v.dtype), v, (((2,), (1,)), ((0,), (0,))),
                        preferred_element_type=jnp.float32)  # (H, tq, dk)
    # Emit directly in combined (tq, H*dk) layout -> combine-heads is a free reshape.
    o_ref[...] = jnp.concatenate([o[h] for h in range(H)], axis=-1).astype(o_ref.dtype)


def scaled_dot_product_attention(q, k, v):
    """q, k, v: (B, H, S, dk) f32.
    Returns (output (B, Sq, H*dk), weights (B, H, Sq, Sk))."""
    B, H, Sq, dk = q.shape
    Sk = k.shape[2]
    scale = 1.0 / math.sqrt(dk)
    tq = _pick_tile(Sq, 256, 8)
    grid = (B, Sq // tq)

    kernel = functools.partial(_attn_kernel, scale=scale)

    q_spec = pl.BlockSpec((None, H, tq, dk), lambda b, qi: (b, 0, qi, 0))
    kv_spec = pl.BlockSpec((None, H, Sk, dk), lambda b, qi: (b, 0, 0, 0))
    o_spec = pl.BlockSpec((None, tq, H * dk), lambda b, qi: (b, qi, 0))
    w_spec = pl.BlockSpec((None, H, tq, Sk), lambda b, qi: (b, 0, qi, 0))

    blk_bytes = 4 * (H * tq * dk + 2 * H * Sk * dk + tq * H * dk + H * tq * Sk)
    out, w = pl.pallas_call(
        kernel,
        out_shape=(
            jax.ShapeDtypeStruct((B, Sq, H * dk), jnp.float32),
            jax.ShapeDtypeStruct((B, H, Sq, Sk), jnp.float32),
        ),
        grid=grid,
        in_specs=[q_spec, kv_spec, kv_spec],
        out_specs=(o_spec, w_spec),
        compiler_params=pltpu.CompilerParams(
            dimension_semantics=("parallel", "parallel"),
            vmem_limit_bytes=_vmem_limit(blk_bytes),
        ),
    )(q, k, v)
    return out, w


# ---------------------------------------------------------------------------
# MultiHeadAttention forward (glue in plain JAX, hot paths in Pallas)
# ---------------------------------------------------------------------------
def multi_head_attention(params, query, key, value, num_heads, mask=None):
    """query/key/value: (B, S, d_model).
    Returns (output (B, Sq, d_model), attn_weights (B, num_heads, Sq, Sk))."""
    # TODO(synk): mask support (masked_fill(-inf) before softmax) not wired in.
    assert mask is None, "mask is not supported in this Pallas port"
    B, Sq, d_model = query.shape
    Sk = key.shape[1]
    d_k = d_model // num_heads

    if (query is key) and (key is value):
        # Self-attention: fused QKV projection -- input is read from HBM once.
        qkv = linear(query.reshape(B * Sq, d_model), params["w_qkv_t"], params["b_qkv"])
        Qf, Kf, Vf = jnp.split(qkv, 3, axis=1)
        Q = Qf.reshape(B, Sq, d_model)
        K = Kf.reshape(B, Sk, d_model)
        V = Vf.reshape(B, Sk, d_model)
    else:
        Q = linear(query.reshape(B * Sq, d_model), params["wq_t"], params["bq"]).reshape(B, Sq, d_model)
        K = linear(key.reshape(B * Sk, d_model), params["wk_t"], params["bk"]).reshape(B, Sk, d_model)
        V = linear(value.reshape(B * Sk, d_model), params["wv_t"], params["bv"]).reshape(B, Sk, d_model)

    def split_heads(x, S):
        # (B, S, d_model) -> (B, H, S, d_k)
        return x.reshape(B, S, num_heads, d_k).transpose(0, 2, 1, 3)

    Qh = split_heads(Q, Sq)
    Kh = split_heads(K, Sk)
    Vh = split_heads(V, Sk)

    attn_out, attn_weights = scaled_dot_product_attention(Qh, Kh, Vh)
    # attn_out is already (B, Sq, num_heads * d_k) == (B, Sq, d_model): free combine.
    out = linear(attn_out.reshape(B * Sq, d_model), params["wo_t"], params["bo"])
    return out.reshape(B, Sq, d_model), attn_weights


# ---------------------------------------------------------------------------
# Parameters (PyTorch nn.Linear style) + one-time kernel-layout prep
# ---------------------------------------------------------------------------
def init_params(key, d_model):
    bound = 1.0 / math.sqrt(d_model)
    keys = jax.random.split(key, 8)
    u = lambda k, shape: jax.random.uniform(k, shape, jnp.float32, -bound, bound)
    return {
        "wq": u(keys[0], (d_model, d_model)), "bq": u(keys[1], (d_model,)),
        "wk": u(keys[2], (d_model, d_model)), "bk": u(keys[3], (d_model,)),
        "wv": u(keys[4], (d_model, d_model)), "bv": u(keys[5], (d_model,)),
        "wo": u(keys[6], (d_model, d_model)), "bo": u(keys[7], (d_model,)),
    }


def prepare_params(p):
    """One-time layout prep outside the hot path: pre-transpose every weight to
    (Din, Dout) and build the fused QKV weight/bias."""
    return {
        "wq_t": p["wq"].T, "bq": p["bq"],
        "wk_t": p["wk"].T, "bk": p["bk"],
        "wv_t": p["wv"].T, "bv": p["bv"],
        "wo_t": p["wo"].T, "bo": p["bo"],
        "w_qkv_t": jnp.concatenate([p["wq"].T, p["wk"].T, p["wv"].T], axis=1),
        "b_qkv": jnp.concatenate([p["bq"], p["bk"], p["bv"]]),
    }


# ---------------------------------------------------------------------------
# Pure-JAX reference for verification
# ---------------------------------------------------------------------------
def reference_mha(params, query, key, value, num_heads):
    B, S, d_model = query.shape
    d_k = d_model // num_heads
    lin = lambda x, w, b: x @ w.T + b
    Q = lin(query, params["wq"], params["bq"])
    K = lin(key, params["wk"], params["bk"])
    V = lin(value, params["wv"], params["bv"])
    sh = lambda x: x.reshape(B, -1, num_heads, d_k).transpose(0, 2, 1, 3)
    Q, K, V = sh(Q), sh(K), sh(V)
    scores = jnp.einsum("bhqd,bhkd->bhqk", Q, K) / math.sqrt(d_k)
    w = jax.nn.softmax(scores, axis=-1)
    o = jnp.einsum("bhqk,bhkd->bhqd", w, V)
    o = o.transpose(0, 2, 1, 3).reshape(B, S, d_model)
    o = lin(o, params["wo"], params["bo"])
    return o, w


if __name__ == "__main__":
    B, S, d_model, num_heads = 2, 8, 32, 4

    root = jax.random.PRNGKey(0)
    k_params, k_q, k_k, k_v = jax.random.split(root, 4)
    torch_style_params = init_params(k_params, d_model)
    params = prepare_params(torch_style_params)

    query = jax.random.normal(k_q, (B, S, d_model), jnp.float32)
    key_in = jax.random.normal(k_k, (B, S, d_model), jnp.float32)
    value = jax.random.normal(k_v, (B, S, d_model), jnp.float32)

    # --- cross-attention path (three separate tiled projection kernels) ---
    out, attn_w = multi_head_attention(params, query, key_in, value, num_heads)
    out = jax.block_until_ready(out)
    attn_w = jax.block_until_ready(attn_w)
    ref_out, ref_w = reference_mha(torch_style_params, query, key_in, value, num_heads)
    assert out.shape == (B, S, d_model)
    assert attn_w.shape == (B, num_heads, S, S)
    assert jnp.allclose(out, ref_out, atol=5e-3, rtol=5e-3)
    assert jnp.allclose(attn_w, ref_w, atol=5e-3, rtol=5e-3)

    # --- self-attention path (fused QKV projection kernel) ---
    out_sa, attn_w_sa = multi_head_attention(params, query, query, query, num_heads)
    out_sa = jax.block_until_ready(out_sa)
    attn_w_sa = jax.block_until_ready(attn_w_sa)
    ref_out_sa, ref_w_sa = reference_mha(torch_style_params, query, query, query, num_heads)
    assert jnp.allclose(out_sa, ref_out_sa, atol=5e-3, rtol=5e-3)
    assert jnp.allclose(attn_w_sa, ref_w_sa, atol=5e-3, rtol=5e-3)

    print("KERNEL_OK")
</pallas_src>

<mosaic_0001>
module attributes {stable_mosaic.version = 11 : i64} {
  func.func @_linear_kernel(%arg0: i32, %arg1: i32, %arg2: i32, %arg3: memref<16x32xf32, #tpu.memory_space<vmem>>, %arg4: memref<32x32xf32, #tpu.memory_space<vmem>>, %arg5: memref<1x32xf32, #tpu.memory_space<vmem>>, %arg6: memref<16x32xf32, #tpu.memory_space<vmem>>, %arg7: memref<16x32xf32, #tpu.memory_space<vmem>>) attributes {dimension_semantics = [#tpu.dimension_semantics<parallel>, #tpu.dimension_semantics<parallel>, #tpu.dimension_semantics<arbitrary>], iteration_bounds = array<i64: 1, 1, 1>, scalar_prefetch = 0 : i64, scratch_operands = 1 : i64, tpu.core_type = #tpu.core_type<tc>, window_params = [{transform_indices = @transform_0, window_bounds = array<i64: 16, 32>}, {transform_indices = @transform_1, window_bounds = array<i64: 32, 32>}, {transform_indices = @transform_2, window_bounds = array<i64: 1, 32>}, {transform_indices = @transform_3, window_bounds = array<i64: 16, 32>}]} {
    %c0_i32 = arith.constant 0 : i32
    %0 = arith.cmpi eq, %arg2, %c0_i32 : i32
    %1 = arith.extui %0 : i1 to i32
    %c0_i32_0 = arith.constant 0 : i32
    %2 = arith.cmpi ne, %1, %c0_i32_0 : i32
    scf.if %2 {
      %cst_10 = arith.constant 0.000000e+00 : f32
      %12 = vector.broadcast %cst_10 : f32 to vector<16x32xf32>
      %c0_11 = arith.constant 0 : index
      %c0_12 = arith.constant 0 : index
      %13 = vector.load %arg7[%c0_11, %c0_12] : memref<16x32xf32, #tpu.memory_space<vmem>>, vector<16x32xf32>
      tpu.vector_store %arg7[%c0_11, %c0_12], %12 {strides = array<i32>} : memref<16x32xf32, #tpu.memory_space<vmem>>, vector<16x32xf32>,
    } else {
    }
    %c0 = arith.constant 0 : index
    %c0_1 = arith.constant 0 : index
    %3 = vector.load %arg7[%c0, %c0_1] : memref<16x32xf32, #tpu.memory_space<vmem>>, vector<16x32xf32>
    %c0_2 = arith.constant 0 : index
    %c0_3 = arith.constant 0 : index
    %4 = vector.load %arg3[%c0_2, %c0_3] : memref<16x32xf32, #tpu.memory_space<vmem>>, vector<16x32xf32>
    %c0_4 = arith.constant 0 : index
    %c0_5 = arith.constant 0 : index
    %5 = vector.load %arg4[%c0_4, %c0_5] : memref<32x32xf32, #tpu.memory_space<vmem>>, vector<32x32xf32>
    %cst = arith.constant dense<0.000000e+00> : vector<16x32xf32>
    %6 = tpu.matmul %4, %5, %cst {dimension_numbers = #tpu.dot_dimension_numbers<[1], [0], [0], [1], [0, 0, 1, 1], [], []>} : vector<16x32xf32>, vector<32x32xf32>, vector<16x32xf32> -> vector<16x32xf32>
    %7 = arith.addf %3, %6 : vector<16x32xf32>
    %c0_6 = arith.constant 0 : index
    %c0_7 = arith.constant 0 : index
    %8 = vector.load %arg7[%c0_6, %c0_7] : memref<16x32xf32, #tpu.memory_space<vmem>>, vector<16x32xf32>
    tpu.vector_store %arg7[%c0_6, %c0_7], %7 {strides = array<i32>} : memref<16x32xf32, #tpu.memory_space<vmem>>, vector<16x32xf32>,
    %c0_i32_8 = arith.constant 0 : i32
    %9 = arith.cmpi eq, %arg2, %c0_i32_8 : i32
    %10 = arith.extui %9 : i1 to i32
    %c0_i32_9 = arith.constant 0 : i32
    %11 = arith.cmpi ne, %10, %c0_i32_9 : i32
    scf.if %11 {
      %c0_10 = arith.constant 0 : index
      %c0_11 = arith.constant 0 : index
      %12 = vector.load %arg7[%c0_10, %c0_11] : memref<16x32xf32, #tpu.memory_space<vmem>>, vector<16x32xf32>
      %c0_12 = arith.constant 0 : index
      %c0_13 = arith.constant 0 : index
      %13 = vector.load %arg5[%c0_12, %c0_13] : memref<1x32xf32, #tpu.memory_space<vmem>>, vector<1x32xf32>
      %14 = vector.broadcast %13 : vector<1x32xf32> to vector<16x32xf32>
      %15 = arith.addf %12, %14 : vector<16x32xf32>
      %c0_14 = arith.constant 0 : index
      %c0_15 = arith.constant 0 : index
      %16 = vector.load %arg6[%c0_14, %c0_15] : memref<16x32xf32, #tpu.memory_space<vmem>>, vector<16x32xf32>
      tpu.vector_store %arg6[%c0_14, %c0_15], %15 {strides = array<i32>} : memref<16x32xf32, #tpu.memory_space<vmem>>, vector<16x32xf32>,
    } else {
    }
    return
  }
  func.func @transform_0(%arg0: i32, %arg1: i32, %arg2: i32) -> (i32, i32) {
    %c0_i32 = arith.constant 0 : i32
    return %arg0, %arg2 : i32, i32
  }
  func.func @transform_1(%arg0: i32, %arg1: i32, %arg2: i32) -> (i32, i32) {
    %c0_i32 = arith.constant 0 : i32
    return %arg2, %arg1 : i32, i32
  }
  func.func @transform_2(%arg0: i32, %arg1: i32, %arg2: i32) -> (i32, i32) {
    %c0_i32 = arith.constant 0 : i32
    %c0_i32_0 = arith.constant 0 : i32
    return %c0_i32, %arg1 : i32, i32
  }
  func.func @transform_3(%arg0: i32, %arg1: i32, %arg2: i32) -> (i32, i32) {
    %c0_i32 = arith.constant 0 : i32
    return %arg0, %arg1 : i32, i32
  }
}

</mosaic_0001>

<llo_original>
// kernel: tpu_custom_call.1
$region0: #{tpu_custom_call.1}
  #allocation0 [shape = 'u32[]', space=smem, size = 0x4, offset = 0x4, fixed_abs, tag = 'smem constant byte address 0x4 - core index']
  #allocation1 [shape = 'u32[144,128]{1,0:T(1,128)}', space=vmem, size = 0x12000, scoped, tag = 'internal scratch']
  #allocation2 [shape = 'f32[16,32]{1,0:T(8,128)}', space=vmem, size = 0x2000, scoped, tag = 'scratch operand']
  %s0 = inlined_call_operand.hbm [shape: f32[16,32], index: 0, kind: input, shape index: {}]
  %s1 = inlined_call_operand.hbm [shape: f32[32,32], index: 1, kind: input, shape index: {}]
  %s2 = inlined_call_operand.vmem [shape: f32[1,32], index: 2, kind: input, shape index: {}]
  %s3 = inlined_call_operand.hbm [shape: f32[16,32], index: 3, kind: output, shape index: {}]
  %s4 = sld [smem:[#allocation0]]
  $region38: #{tpu_custom_call.1} parent=0
    _
  %s6 = ssub.s32 1, %s4
  %s7 = scalar_select 0, %s6, %s4
  $region1: #{tpu_custom_call.1} parent=0
    #allocation3 [shape = 'u8[8192]{0}', space=vmem, size = 0x2000, scoped, tag = 'input window, operand 0, single buffered']
    #allocation4 [shape = 's32[1]{0}', space=sflag, size = 0x4, scoped, tag = 'scoped memory for tpu_custom_call.1']
    #allocation5 [shape = 's32[1]{0}', space=sflag, size = 0x4, scoped, tag = 'scoped memory for tpu_custom_call.1']
    #allocation6 [shape = 'u8[16384]{0}', space=vmem, size = 0x4000, scoped, tag = 'input window, operand 1, single buffered']
    #allocation7 [shape = 's32[1]{0}', space=sflag, size = 0x4, scoped, tag = 'scoped memory for tpu_custom_call.1']
    #allocation8 [shape = 'u8[8192]{0}', space=vmem, size = 0x2000, scoped, tag = 'output window, operand 0, single buffered']
    %8 = vsyncpa [#allocation4], 0
    %9 = vsyncpa [#allocation7], 0
    %10 = vsyncpa [#allocation5], 0
    // Predicated region
    $region2: #{tpu_custom_call.1} parent=1 // pred_check
      _
    $region3: #{tpu_custom_call.1} parent=1 // pred_check_branch
      %12 = sbr.rel (0) target = $region5
    $region4: #{tpu_custom_call.1} parent=1 // pred_region
      %s14 = ssub.s32 256, 256
      %15 = vsyncadd [#allocation4], %s14
      %s16 = sshll.u32 [#allocation3], 4
      %s17 = int_to_ptr.vmem [resolvable:$true] %s16
      %22 = dma.hbm_to_vmem [thread:$0]  %s0, 256, %s17, [#allocation4], 128, 128, 8
    $region5: #{tpu_custom_call.1} parent=1 // pred_fallthru
      _
    // Predicated region
    $region6: #{tpu_custom_call.1} parent=1 // pred_check
      _
    $region7: #{tpu_custom_call.1} parent=1 // pred_check_branch
      %24 = sbr.rel (0) target = $region9
    $region8: #{tpu_custom_call.1} parent=1 // pred_region
      %s26 = ssub.s32 512, 512
      %27 = vsyncadd [#allocation7], %s26
      %s28 = sshll.u32 [#allocation6], 4
      %s29 = int_to_ptr.vmem [resolvable:$true] %s28
      %34 = dma.hbm_to_vmem [thread:$0]  %s1, 512, %s29, [#allocation7], 128, 128, 8
    $region9: #{tpu_custom_call.1} parent=1 // pred_fallthru
      _
    // Predicated region
    $region10: #{tpu_custom_call.1} parent=1 // pred_check
      _
    $region11: #{tpu_custom_call.1} parent=1 // pred_check_branch
      %36 = sbr.rel (0) target = $region13
    $region12: #{tpu_custom_call.1} parent=1 // pred_region
      _
    $region13: #{tpu_custom_call.1} parent=1 // pred_fallthru
      _
    // Predicated region
    $region14: #{tpu_custom_call.1} parent=1 // pred_check
      _
    $region15: #{tpu_custom_call.1} parent=1 // pred_check_branch
      %38 = sbr.rel (0) target = $region17
    $region16: #{tpu_custom_call.1} parent=1 // pred_region
      %39 = dma.done [#allocation4], 256
    $region17: #{tpu_custom_call.1} parent=1 // pred_fallthru
      _
    // Predicated region
    $region18: #{tpu_custom_call.1} parent=1 // pred_check
      _
    $region19: #{tpu_custom_call.1} parent=1 // pred_check_branch
      %41 = sbr.rel (0) target = $region21
    $region20: #{tpu_custom_call.1} parent=1 // pred_region
      %42 = dma.done [#allocation7], 512
    $region21: #{tpu_custom_call.1} parent=1 // pred_fallthru
      _
    %p43 = scmp.eq.s32.totalorder 0, 0
    // Predicated region
    $region22: #{tpu_custom_call.1} parent=1 // pred_check
      %p44 = pneg %p43
    $region23: #{tpu_custom_call.1} parent=1 // pred_check_branch
      %46 = sbr.rel (%p44) target = $region25
    $region24: #{tpu_custom_call.1} parent=1 // pred_region
      %vm47 = vcmask 261120
      %48 = vst.msk [vmem:[#allocation2] sm:$0xff] %vm47, 0.0
      %49 = vst.msk [vmem:[#allocation2 + $0x8] sm:$0xff] %vm47, 0.0
    $region25: #{tpu_custom_call.1} parent=1 // pred_fallthru
      _
    %v50 = vld [vmem:[#allocation2] sm:$0xff]
    %v51 = vld [vmem:[#allocation2 + $0x8] sm:$0xff]
    %v52 = vld [vmem:[#allocation3] sm:$0xff]
    %v53 = vld [vmem:[#allocation3 + $0x8] sm:$0xff]
    %v54 = vld [vmem:[#allocation6] sm:$0xff]
    %v55 = vld [vmem:[#allocation6 + $0x8] sm:$0xff]
    %v56 = vld [vmem:[#allocation6 + $0x10] sm:$0xff]
    %v57 = vld [vmem:[#allocation6 + $0x18] sm:$0xff]
    %vm58 = vcmask 261120
    %v60 = vsel %vm58, %v52, 0
    %v63 = vsel %vm58, %v53, 0
    %65 = vmatprep.subr.mxu0 0.0
    %66 = vmatpush1.msra.mxu0 %v54
    %67 = vmatprep.subr.mxu0 0.0
    %68 = vmatpush1.msra.mxu0 %v55
    %69 = vmatprep.subr.mxu0 0.0
    %70 = vmatpush1.msra.mxu0 %v56
    %71 = vmatprep.subr.mxu0 0.0
    %72 = vmatpush1.msra.mxu0 %v57
    %73 = vmatprep.subr.mxu0 0.0
    %74 = vmatpush1.msra.mxu0 0.0
    %75 = vmatprep.subr.mxu0 0.0
    %76 = vmatpush1.msra.mxu0 0.0
    %77 = vmatprep.subr.mxu0 0.0
    %78 = vmatpush1.msra.mxu0 0.0
    %79 = vmatprep.subr.mxu0 0.0
    %80 = vmatpush1.msra.mxu0 0.0
    %81 = vmatprep.subr.mxu0 0.0
    %82 = vmatpush1.msra.mxu0 0.0
    %83 = vmatprep.subr.mxu0 0.0
    %84 = vmatpush1.msra.mxu0 0.0
    %85 = vmatprep.subr.mxu0 0.0
    %86 = vmatpush1.msra.mxu0 0.0
    %87 = vmatprep.subr.mxu0 0.0
    %88 = vmatpush1.msra.mxu0 0.0
    %89 = vmatprep.subr.mxu0 0.0
    %90 = vmatpush1.msra.mxu0 0.0
    %91 = vmatprep.subr.mxu0 0.0
    %92 = vmatpush1.msra.mxu0 0.0
    %93 = vmatprep.subr.mxu0 0.0
    %94 = vmatpush1.msra.mxu0 0.0
    %95 = vmatprep.subr.mxu0 0.0
    %96 = vmatpush1.msra.mxu0 0.0
    %97 = vmatprep.subr.mxu0 0.0
    %98 = vmatpush1.msra.mxu0 0.0
    %99 = vmatprep.subr.mxu0 0.0
    %100 = vmatpush1.msra.mxu0 0.0
    %101 = vmatprep.subr.mxu0 0.0
    %102 = vmatpush1.msra.mxu0 0.0
    %103 = vmatprep.subr.mxu0 0.0
    %104 = vmatpush1.msra.mxu0 0.0
    %105 = vmatprep.subr.mxu0 0.0
    %106 = vmatpush1.msra.mxu0 0.0
    %107 = vmatprep.subr.mxu0 0.0
    %108 = vmatpush1.msra.mxu0 0.0
    %109 = vmatprep.subr.mxu0 0.0
    %110 = vmatpush1.msra.mxu0 0.0
    %111 = vmatprep.subr.mxu0 0.0
    %112 = vmatpush1.msra.mxu0 0.0
    %113 = vmatprep.subr.mxu0 0.0
    %114 = vmatpush1.msra.mxu0 0.0
    %115 = vmatprep.subr.mxu0 0.0
    %116 = vmatpush1.msra.mxu0 0.0
    %117 = vmatprep.subr.mxu0 0.0
    %118 = vmatpush1.msra.mxu0 0.0
    %119 = vmatprep.subr.mxu0 0.0
    %120 = vmatpush1.msra.mxu0 0.0
    %121 = vmatprep.subr.mxu0 0.0
    %122 = vmatpush1.msra.mxu0 0.0
    %123 = vmatprep.subr.mxu0 0.0
    %124 = vmatpush1.msra.mxu0 0.0
    %125 = vmatprep.subr.mxu0 0.0
    %126 = vmatpush1.msra.mxu0 0.0
    %127 = vmatprep.subr.mxu0 0.0
    %128 = vmatpush1.msra.mxu0 0.0
    %129 = vmatprep.mubr.f32.mxu0 0.0
    %130 = vmatmul.mubr.f32.gmra.mrb[0].mxu0 %v60
    %v131 = vpop.f32.mrb[0].mxu0
    %v132 = vadd.f32 0.0, %v131
    %v133 = vpop.f32.mrb[0].mxu0
    %134 = vmatprep.mubr.f32.mxu0 0.0
    %135 = vmatmul.mubr.f32.gmra.mrb[0].mxu0 %v63
    %v136 = vpop.f32.mrb[0].mxu0
    %v137 = vadd.f32 0.0, %v136
    %v138 = vpop.f32.mrb[0].mxu0
    %139 = vdwg.mxu0
    %v140 = vadd.f32 %v50, %v132
    %v141 = vadd.f32 %v51, %v137
    %142 = vst.msk [vmem:[#allocation2] sm:$0xff] %vm58, %v140
    %143 = vst.msk [vmem:[#allocation2 + $0x8] sm:$0xff] %vm58, %v141
    // Predicated region
    $region26: #{tpu_custom_call.1} parent=1 // pred_check
      %p144 = pneg %p43
    $region27: #{tpu_custom_call.1} parent=1 // pred_check_branch
      %146 = sbr.rel (%p144) target = $region29
    $region28: #{tpu_custom_call.1} parent=1 // pred_region
      %v147 = vld [vmem:[#allocation2] sm:$0xff]
      %v148 = vld [vmem:[#allocation2 + $0x8] sm:$0xff]
      %v149 = vld [vmem:[%s2] sm:$0x1]
      %v151 = vlaneseq
      %v152 = vshrl.u32 %v151, 7
      %v153 = vsub.s32 0, %v152
      %v154 = vrot.slane %v149, %v153
      %v156 = vadd.f32 %v147, %v154
      %v157 = vadd.f32 %v148, %v154
      %158 = vst.msk [vmem:[#allocation8] sm:$0xff] %vm58, %v156
      %159 = vst.msk [vmem:[#allocation8 + $0x8] sm:$0xff] %vm58, %v157
    $region29: #{tpu_custom_call.1} parent=1 // pred_fallthru
      _
    // Predicated region
    $region30: #{tpu_custom_call.1} parent=1 // pred_check
      _
    $region31: #{tpu_custom_call.1} parent=1 // pred_check_branch
      %161 = sbr.rel (0) target = $region33
    $region32: #{tpu_custom_call.1} parent=1 // pred_region
      %s163 = ssub.s32 256, 256
      %164 = vsyncadd [#allocation5], %s163
      %s165 = sshll.u32 [#allocation8], 4
      %s166 = int_to_ptr.vmem [resolvable:$true] %s165
      %171 = dma.vmem_to_hbm [thread:$0]  %s166, 256, %s3, [#allocation5], 128, 128, 8
    $region33: #{tpu_custom_call.1} parent=1 // pred_fallthru
      _
    // Predicated region
    $region34: #{tpu_custom_call.1} parent=1 // pred_check
      _
    $region35: #{tpu_custom_call.1} parent=1 // pred_check_branch
      %173 = sbr.rel (0) target = $region37
    $region36: #{tpu_custom_call.1} parent=1 // pred_region
      %174 = dma.done [#allocation5], 256
    $region37: #{tpu_custom_call.1} parent=1 // pred_fallthru
      _
    %175 = vsyncpa [#allocation4], 1
    %176 = vsyncpa [#allocation7], 1
    %177 = vsyncpa [#allocation5], 1

</llo_original>
